<compile_context>
chip_gen: v5e
topology: v5e:2x2
jax: 0.10.0
libtpu: 0.0.40
codegen_flags: <defaults>
</compile_context>

<pallas_src>
import jax
import jax.numpy as jnp
from jax.experimental import pallas as pl
from jax.experimental.pallas import tpu as pltpu

LANES = 128  # vreg lane width


# ----------------------------------------------------------------------------
# Fused Pallas kernel: the whole Tree for one packed slab of batch items
# ----------------------------------------------------------------------------
def _tree_kernel(x_ref, shifts_ref, bands_ref, bias_ref, o_ref):
    """x_ref:      (1, H, WCP)    lane-dense activations, WCP = n_pack*W*C
       shifts_ref: (2, H, H)      [0]=s_dn (row h <- h-1), [1]=s_up (row h <- h+1)
                                  zero first/last row implements SAME height pad
       bands_ref:  (14, WCP, WCP) block-diagonal banded conv matrices (BN scale
                                  folded): [0:3] t1.conv1 (kh=0,1,2), [3:6]
                                  t1.conv2, [6:9] t2.conv1, [9:12] t2.conv2,
                                  [12] root on x2, [13] root on x1
       bias_ref:   (5, WCP)       folded BN biases (tiled per lane position)
       o_ref:      (1, H, WCP)
    """
    f32 = jnp.float32
    x2d = x_ref[0]                     # (H, WCP)
    s_dn = shifts_ref[0]               # (H, H)
    s_up = shifts_ref[1]               # (H, H)

    # Hoisted bias loads (one VMEM read each; avoids per-conv re-slice).
    b_t1c1 = bias_ref[0:1, :]
    b_t1c2 = bias_ref[1:2, :]
    b_t2c1 = bias_ref[2:3, :]
    b_t2c2 = bias_ref[3:4, :]
    b_root = bias_ref[4:5, :]

    def conv3x3_bn(a, base, bias):
        # Three independent fat (H,WCP)x(WCP,WCP) MXU pushes first...
        b0 = jnp.dot(a, bands_ref[base + 0], preferred_element_type=f32)
        b1 = jnp.dot(a, bands_ref[base + 1], preferred_element_type=f32)
        b2 = jnp.dot(a, bands_ref[base + 2], preferred_element_type=f32)
        # ...then the small (H,H) height shifts on their results
        # (s_dn @ (a @ B0) == (s_dn @ a) @ B0).
        acc = b1 + jnp.dot(s_dn, b0, preferred_element_type=f32)
        acc = acc + jnp.dot(s_up, b2, preferred_element_type=f32)
        return acc + bias

    # tree1 = BasicBlock(x, residual=x)
    t1 = jnp.maximum(conv3x3_bn(x2d, 0, b_t1c1), 0.0)
    x1 = jnp.maximum(conv3x3_bn(t1, 3, b_t1c2) + x2d, 0.0)
    # tree2 = BasicBlock(x1) with residual = x1
    t2 = jnp.maximum(conv3x3_bn(x1, 6, b_t2c1), 0.0)
    x2 = jnp.maximum(conv3x3_bn(t2, 9, b_t2c2) + x1, 0.0)
    # root: relu(bn(conv1x1(cat([x2, x1], C)))) -- concat folded into two matmuls
    out = jnp.dot(x2, bands_ref[12], preferred_element_type=f32)
    out = out + jnp.dot(x1, bands_ref[13], preferred_element_type=f32)
    o_ref[0] = jnp.maximum(out + b_root, 0.0)


# ----------------------------------------------------------------------------
# One-time (model-load) parameter packing: banded weights, folded BN, shifts
# ----------------------------------------------------------------------------
def _band_conv3x3(w3, scale, W):
    """(3,3,Cin,Cout) weight + BN scale -> 3 banded (W*Cin, W*Cout) matrices.

    band_kh[w_in*Cin + i, w_out*Cout + o] = w3[kh, kw, i, o] * scale[o]
    with w_in = w_out + kw - 1 (zero outside [0, W): SAME width padding)."""
    ws = (w3 * scale[None, None, None, :]).astype(jnp.float32)
    Cin, Cout = w3.shape[2], w3.shape[3]
    mats = []
    for kh in range(3):
        b = jnp.zeros((W * Cin, W * Cout), jnp.float32)
        for kw in range(3):
            p = jnp.eye(W, W, k=-(kw - 1), dtype=jnp.float32)
            b = b + jnp.kron(p, ws[kh, kw])
        mats.append(b)
    return mats


def choose_n_pack(W, C):
    wc = W * C
    if wc <= LANES and LANES % wc == 0:
        return LANES // wc
    return 1


def pack_tree_params(p, H, W, C, n_pack):
    """Run ONCE at model-load time (hoisted out of the per-call jit)."""
    mats = []
    mats += _band_conv3x3(p["t1_conv1_w"], p["t1_bn1_scale"], W)
    mats += _band_conv3x3(p["t1_conv2_w"], p["t1_bn2_scale"], W)
    mats += _band_conv3x3(p["t2_conv1_w"], p["t2_bn1_scale"], W)
    mats += _band_conv3x3(p["t2_conv2_w"], p["t2_bn2_scale"], W)
    root_s = (p["root_w"] * p["root_bn_scale"][None, :]).astype(jnp.float32)
    eye_w = jnp.eye(W, dtype=jnp.float32)
    mats.append(jnp.kron(eye_w, root_s[:C, :]))   # root acting on x2
    mats.append(jnp.kron(eye_w, root_s[C:, :]))   # root acting on x1

    # Lane-dense packing of n_pack batch items -> block-diagonal bands.
    eye_p = jnp.eye(n_pack, dtype=jnp.float32)
    bands = jnp.stack([jnp.kron(eye_p, m) for m in mats])      # (14, WCP, WCP)

    reps = W * n_pack
    biases = jnp.stack([
        jnp.tile(p["t1_bn1_bias"], reps),
        jnp.tile(p["t1_bn2_bias"], reps),
        jnp.tile(p["t2_bn1_bias"], reps),
        jnp.tile(p["t2_bn2_bias"], reps),
        jnp.tile(p["root_bn_bias"], reps),
    ]).astype(jnp.float32)                                      # (5, WCP)

    # Height-shift matrices (SAME height padding via zero first/last row).
    shifts = jnp.stack([
        jnp.eye(H, k=-1, dtype=jnp.float32),   # (s_dn @ a)[h] = a[h-1]
        jnp.eye(H, k=1, dtype=jnp.float32),    # (s_up @ a)[h] = a[h+1]
    ])                                                          # (2, H, H)

    # VMEM guard: the resident band slab is 14*(n_pack*W*C)^2*4 B and is
    # double-buffered by the pipeline; tile W / shrink n_pack before this
    # approaches v7x's 64 MiB VMEM (or the 32 MiB default scoped limit).
    assert 2 * bands.size * 4 < 24 * 1024 * 1024, (
        "band slab too large for VMEM; tile W or reduce lane packing")
    return shifts, bands, biases


# ----------------------------------------------------------------------------
# Jitted forward: lane-dense pack -> single fused pallas_call -> unpack
# ----------------------------------------------------------------------------
@jax.jit
def tree_forward(x_nhwc, shifts, bands, biases):
    N, H, W, C = x_nhwc.shape
    WC = W * C
    WCP = bands.shape[-1]
    n_pack = WCP // WC
    NB = -(-N // n_pack)
    n_pad = NB * n_pack

    x = x_nhwc.astype(jnp.float32).reshape(N, H, WC)
    if n_pad != N:
        x = jnp.concatenate(
            [x, jnp.zeros((n_pad - N, H, WC), jnp.float32)], axis=0)
    # Pack n_pack items along the lane axis: (NB, H, n_pack*WC), lane-dense.
    x = x.reshape(NB, n_pack, H, WC).transpose(0, 2, 1, 3).reshape(NB, H, WCP)

    flops = NB * (14 * 2 * H * WCP * WCP + 4 * 2 * 2 * H * H * WCP)
    bytes_accessed = 4 * (2 * NB * H * WCP
                          + bands.size + shifts.size + biases.size)

    out = pl.pallas_call(
        _tree_kernel,
        out_shape=jax.ShapeDtypeStruct((NB, H, WCP), jnp.float32),
        grid=(NB,),
        in_specs=[
            pl.BlockSpec((1, H, WCP), lambda n: (n, 0, 0)),
            pl.BlockSpec(shifts.shape, lambda n: (0, 0, 0)),   # resident
            pl.BlockSpec(bands.shape, lambda n: (0, 0, 0)),    # resident
            pl.BlockSpec(biases.shape, lambda n: (0, 0)),      # resident
        ],
        out_specs=pl.BlockSpec((1, H, WCP), lambda n: (n, 0, 0)),
        compiler_params=pltpu.CompilerParams(
            dimension_semantics=(("parallel",) if NB > 1 else ("arbitrary",))),
        cost_estimate=pl.CostEstimate(
            flops=flops, transcendentals=0, bytes_accessed=bytes_accessed),
    )(x, shifts, bands, biases)

    out = out.reshape(NB, H, n_pack, WC).transpose(0, 2, 1, 3)
    out = out.reshape(n_pad, H, W, C)
    return out[:N]


# ----------------------------------------------------------------------------
# Parameter construction (deterministic, synthetic)
# ----------------------------------------------------------------------------
def fold_bn(gamma, beta, mean, var, eps=1e-5):
    scale = gamma / jnp.sqrt(var + eps)
    bias = beta - mean * scale
    return scale, bias


def make_params(key, C):
    ks = jax.random.split(key, 16)

    def conv3(k, cin, cout):
        return 0.1 * jax.random.normal(k, (3, 3, cin, cout), jnp.float32)

    def bn(k, c):
        k1, k2, k3, k4 = jax.random.split(k, 4)
        gamma = 1.0 + 0.1 * jax.random.normal(k1, (c,), jnp.float32)
        beta = 0.05 * jax.random.normal(k2, (c,), jnp.float32)
        mean = 0.1 * jax.random.normal(k3, (c,), jnp.float32)
        var = 0.5 + jnp.abs(jax.random.normal(k4, (c,), jnp.float32))
        return fold_bn(gamma, beta, mean, var)

    p = {}
    p["t1_conv1_w"] = conv3(ks[0], C, C)
    p["t1_bn1_scale"], p["t1_bn1_bias"] = bn(ks[1], C)
    p["t1_conv2_w"] = conv3(ks[2], C, C)
    p["t1_bn2_scale"], p["t1_bn2_bias"] = bn(ks[3], C)
    p["t2_conv1_w"] = conv3(ks[4], C, C)
    p["t2_bn1_scale"], p["t2_bn1_bias"] = bn(ks[5], C)
    p["t2_conv2_w"] = conv3(ks[6], C, C)
    p["t2_bn2_scale"], p["t2_bn2_bias"] = bn(ks[7], C)
    p["root_w"] = 0.1 * jax.random.normal(ks[8], (2 * C, C), jnp.float32)
    p["root_bn_scale"], p["root_bn_bias"] = bn(ks[9], C)
    return p


# ----------------------------------------------------------------------------
# Pure-JAX reference (for verification)
# ----------------------------------------------------------------------------
def _ref_conv3(x, w):
    return jax.lax.conv_general_dilated(
        x, w, window_strides=(1, 1), padding="SAME",
        dimension_numbers=("NHWC", "HWIO", "NHWC"),
        precision=jax.lax.Precision.HIGHEST)


def tree_forward_ref(x, p):
    def block(x, residual, w1, s1, b1, w2, s2, b2):
        h = jnp.maximum(_ref_conv3(x, w1) * s1 + b1, 0.0)
        h = _ref_conv3(h, w2) * s2 + b2 + residual
        return jnp.maximum(h, 0.0)

    x1 = block(x, x, p["t1_conv1_w"], p["t1_bn1_scale"], p["t1_bn1_bias"],
               p["t1_conv2_w"], p["t1_bn2_scale"], p["t1_bn2_bias"])
    x2 = block(x1, x1, p["t2_conv1_w"], p["t2_bn1_scale"], p["t2_bn1_bias"],
               p["t2_conv2_w"], p["t2_bn2_scale"], p["t2_bn2_bias"])
    cat = jnp.concatenate([x2, x1], axis=-1)
    out = jnp.einsum("nhwc,co->nhwo", cat, p["root_w"],
                     precision=jax.lax.Precision.HIGHEST)
    return jnp.maximum(out * p["root_bn_scale"] + p["root_bn_bias"], 0.0)


# ----------------------------------------------------------------------------
if __name__ == "__main__":
    N, C, H, W = 2, 4, 16, 16
    key = jax.random.PRNGKey(0)
    kx, kp = jax.random.split(key)

    x_nchw = jax.random.normal(kx, (N, C, H, W), jnp.float32)   # PyTorch layout
    x_nhwc = jnp.transpose(x_nchw, (0, 2, 3, 1))                # kernel layout

    params = make_params(kp, C)

    # Model-load-time packing (runs once; NOT inside the per-call jit).
    n_pack = choose_n_pack(W, C)                                # = 2 here
    shifts, bands, biases = pack_tree_params(params, H, W, C, n_pack)

    out = tree_forward(x_nhwc, shifts, bands, biases)
    out = jax.block_until_ready(out)

    ref = tree_forward_ref(x_nhwc, params)
    assert out.shape == (N, H, W, C)
    assert bool(jnp.allclose(out, ref, atol=1e-4, rtol=1e-4)), \
        "mismatch vs JAX reference"

    print("KERNEL_OK")
</pallas_src>

<mosaic_0001>
module attributes {stable_mosaic.version = 11 : i64} {
  func.func @_tree_kernel(%arg0: i32, %arg1: memref<1x16x128xf32, #tpu.memory_space<vmem>>, %arg2: memref<2x16x16xf32, #tpu.memory_space<vmem>>, %arg3: memref<14x128x128xf32, #tpu.memory_space<vmem>>, %arg4: memref<5x128xf32, #tpu.memory_space<vmem>>, %arg5: memref<1x16x128xf32, #tpu.memory_space<vmem>>) attributes {dimension_semantics = [#tpu.dimension_semantics<arbitrary>], iteration_bounds = array<i64: 1>, scalar_prefetch = 0 : i64, scratch_operands = 0 : i64, tpu.core_type = #tpu.core_type<tc>, window_params = [{transform_indices = @transform_0, window_bounds = array<i64: 1, 16, 128>}, {pipeline_mode = #tpu.pipeline_mode<synchronous>, transform_indices = @transform_1, window_bounds = array<i64: 2, 16, 16>}, {pipeline_mode = #tpu.pipeline_mode<synchronous>, transform_indices = @transform_2, window_bounds = array<i64: 14, 128, 128>}, {pipeline_mode = #tpu.pipeline_mode<synchronous>, transform_indices = @transform_3, window_bounds = array<i64: 5, 128>}, {transform_indices = @transform_4, window_bounds = array<i64: 1, 16, 128>}]} {
    %c0 = arith.constant 0 : index
    %c0_0 = arith.constant 0 : index
    %c0_1 = arith.constant 0 : index
    %0 = vector.load %arg1[%c0, %c0_0, %c0_1] : memref<1x16x128xf32, #tpu.memory_space<vmem>>, vector<1x16x128xf32>
    %1 = vector.shape_cast %0 : vector<1x16x128xf32> to vector<16x128xf32>
    %c0_2 = arith.constant 0 : index
    %c0_3 = arith.constant 0 : index
    %c0_4 = arith.constant 0 : index
    %2 = vector.load %arg2[%c0_2, %c0_3, %c0_4] : memref<2x16x16xf32, #tpu.memory_space<vmem>>, vector<1x16x16xf32>
    %3 = vector.shape_cast %2 : vector<1x16x16xf32> to vector<16x16xf32>
    %c1 = arith.constant 1 : index
    %c0_5 = arith.constant 0 : index
    %c0_6 = arith.constant 0 : index
    %4 = vector.load %arg2[%c1, %c0_5, %c0_6] : memref<2x16x16xf32, #tpu.memory_space<vmem>>, vector<1x16x16xf32>
    %5 = vector.shape_cast %4 : vector<1x16x16xf32> to vector<16x16xf32>
    %c0_7 = arith.constant 0 : index
    %c0_8 = arith.constant 0 : index
    %6 = vector.load %arg4[%c0_7, %c0_8] : memref<5x128xf32, #tpu.memory_space<vmem>>, vector<1x128xf32>
    %c1_9 = arith.constant 1 : index
    %c0_10 = arith.constant 0 : index
    %7 = vector.load %arg4[%c1_9, %c0_10] : memref<5x128xf32, #tpu.memory_space<vmem>>, vector<1x128xf32>
    %c2 = arith.constant 2 : index
    %c0_11 = arith.constant 0 : index
    %8 = vector.load %arg4[%c2, %c0_11] : memref<5x128xf32, #tpu.memory_space<vmem>>, vector<1x128xf32>
    %c3 = arith.constant 3 : index
    %c0_12 = arith.constant 0 : index
    %9 = vector.load %arg4[%c3, %c0_12] : memref<5x128xf32, #tpu.memory_space<vmem>>, vector<1x128xf32>
    %c4 = arith.constant 4 : index
    %c0_13 = arith.constant 0 : index
    %10 = vector.load %arg4[%c4, %c0_13] : memref<5x128xf32, #tpu.memory_space<vmem>>, vector<1x128xf32>
    %c0_14 = arith.constant 0 : index
    %c0_15 = arith.constant 0 : index
    %c0_16 = arith.constant 0 : index
    %11 = vector.load %arg3[%c0_14, %c0_15, %c0_16] : memref<14x128x128xf32, #tpu.memory_space<vmem>>, vector<1x128x128xf32>
    %12 = vector.shape_cast %11 : vector<1x128x128xf32> to vector<128x128xf32>
    %cst = arith.constant dense<0.000000e+00> : vector<16x128xf32>
    %13 = tpu.matmul %1, %12, %cst {dimension_numbers = #tpu.dot_dimension_numbers<[1], [0], [0], [1], [0, 0, 1, 1], [], []>} : vector<16x128xf32>, vector<128x128xf32>, vector<16x128xf32> -> vector<16x128xf32>
    %c1_17 = arith.constant 1 : index
    %c0_18 = arith.constant 0 : index
    %c0_19 = arith.constant 0 : index
    %14 = vector.load %arg3[%c1_17, %c0_18, %c0_19] : memref<14x128x128xf32, #tpu.memory_space<vmem>>, vector<1x128x128xf32>
    %15 = vector.shape_cast %14 : vector<1x128x128xf32> to vector<128x128xf32>
    %cst_20 = arith.constant dense<0.000000e+00> : vector<16x128xf32>
    %16 = tpu.matmul %1, %15, %cst_20 {dimension_numbers = #tpu.dot_dimension_numbers<[1], [0], [0], [1], [0, 0, 1, 1], [], []>} : vector<16x128xf32>, vector<128x128xf32>, vector<16x128xf32> -> vector<16x128xf32>
    %c2_21 = arith.constant 2 : index
    %c0_22 = arith.constant 0 : index
    %c0_23 = arith.constant 0 : index
    %17 = vector.load %arg3[%c2_21, %c0_22, %c0_23] : memref<14x128x128xf32, #tpu.memory_space<vmem>>, vector<1x128x128xf32>
    %18 = vector.shape_cast %17 : vector<1x128x128xf32> to vector<128x128xf32>
    %cst_24 = arith.constant dense<0.000000e+00> : vector<16x128xf32>
    %19 = tpu.matmul %1, %18, %cst_24 {dimension_numbers = #tpu.dot_dimension_numbers<[1], [0], [0], [1], [0, 0, 1, 1], [], []>} : vector<16x128xf32>, vector<128x128xf32>, vector<16x128xf32> -> vector<16x128xf32>
    %cst_25 = arith.constant dense<0.000000e+00> : vector<16x128xf32>
    %20 = tpu.matmul %3, %13, %cst_25 {dimension_numbers = #tpu.dot_dimension_numbers<[1], [0], [0], [1], [0, 0, 1, 1], [], []>} : vector<16x16xf32>, vector<16x128xf32>, vector<16x128xf32> -> vector<16x128xf32>
    %21 = arith.addf %16, %20 : vector<16x128xf32>
    %cst_26 = arith.constant dense<0.000000e+00> : vector<16x128xf32>
    %22 = tpu.matmul %5, %19, %cst_26 {dimension_numbers = #tpu.dot_dimension_numbers<[1], [0], [0], [1], [0, 0, 1, 1], [], []>} : vector<16x16xf32>, vector<16x128xf32>, vector<16x128xf32> -> vector<16x128xf32>
    %23 = arith.addf %21, %22 : vector<16x128xf32>
    %24 = vector.broadcast %6 : vector<1x128xf32> to vector<16x128xf32>
    %25 = arith.addf %23, %24 : vector<16x128xf32>
    %cst_27 = arith.constant 0.000000e+00 : f32
    %26 = vector.broadcast %cst_27 : f32 to vector<16x128xf32>
    %27 = arith.maximumf %25, %26 : vector<16x128xf32>
    %c3_28 = arith.constant 3 : index
    %c0_29 = arith.constant 0 : index
    %c0_30 = arith.constant 0 : index
    %28 = vector.load %arg3[%c3_28, %c0_29, %c0_30] : memref<14x128x128xf32, #tpu.memory_space<vmem>>, vector<1x128x128xf32>
    %29 = vector.shape_cast %28 : vector<1x128x128xf32> to vector<128x128xf32>
    %cst_31 = arith.constant dense<0.000000e+00> : vector<16x128xf32>
    %30 = tpu.matmul %27, %29, %cst_31 {dimension_numbers = #tpu.dot_dimension_numbers<[1], [0], [0], [1], [0, 0, 1, 1], [], []>} : vector<16x128xf32>, vector<128x128xf32>, vector<16x128xf32> -> vector<16x128xf32>
    %c4_32 = arith.constant 4 : index
    %c0_33 = arith.constant 0 : index
    %c0_34 = arith.constant 0 : index
    %31 = vector.load %arg3[%c4_32, %c0_33, %c0_34] : memref<14x128x128xf32, #tpu.memory_space<vmem>>, vector<1x128x128xf32>
    %32 = vector.shape_cast %31 : vector<1x128x128xf32> to vector<128x128xf32>
    %cst_35 = arith.constant dense<0.000000e+00> : vector<16x128xf32>
    %33 = tpu.matmul %27, %32, %cst_35 {dimension_numbers = #tpu.dot_dimension_numbers<[1], [0], [0], [1], [0, 0, 1, 1], [], []>} : vector<16x128xf32>, vector<128x128xf32>, vector<16x128xf32> -> vector<16x128xf32>
    %c5 = arith.constant 5 : index
    %c0_36 = arith.constant 0 : index
    %c0_37 = arith.constant 0 : index
    %34 = vector.load %arg3[%c5, %c0_36, %c0_37] : memref<14x128x128xf32, #tpu.memory_space<vmem>>, vector<1x128x128xf32>
    %35 = vector.shape_cast %34 : vector<1x128x128xf32> to vector<128x128xf32>
    %cst_38 = arith.constant dense<0.000000e+00> : vector<16x128xf32>
    %36 = tpu.matmul %27, %35, %cst_38 {dimension_numbers = #tpu.dot_dimension_numbers<[1], [0], [0], [1], [0, 0, 1, 1], [], []>} : vector<16x128xf32>, vector<128x128xf32>, vector<16x128xf32> -> vector<16x128xf32>
    %cst_39 = arith.constant dense<0.000000e+00> : vector<16x128xf32>
    %37 = tpu.matmul %3, %30, %cst_39 {dimension_numbers = #tpu.dot_dimension_numbers<[1], [0], [0], [1], [0, 0, 1, 1], [], []>} : vector<16x16xf32>, vector<16x128xf32>, vector<16x128xf32> -> vector<16x128xf32>
    %38 = arith.addf %33, %37 : vector<16x128xf32>
    %cst_40 = arith.constant dense<0.000000e+00> : vector<16x128xf32>
    %39 = tpu.matmul %5, %36, %cst_40 {dimension_numbers = #tpu.dot_dimension_numbers<[1], [0], [0], [1], [0, 0, 1, 1], [], []>} : vector<16x16xf32>, vector<16x128xf32>, vector<16x128xf32> -> vector<16x128xf32>
    %40 = arith.addf %38, %39 : vector<16x128xf32>
    %41 = vector.broadcast %7 : vector<1x128xf32> to vector<16x128xf32>
    %42 = arith.addf %40, %41 : vector<16x128xf32>
    %43 = arith.addf %42, %1 : vector<16x128xf32>
    %cst_41 = arith.constant 0.000000e+00 : f32
    %44 = vector.broadcast %cst_41 : f32 to vector<16x128xf32>
    %45 = arith.maximumf %43, %44 : vector<16x128xf32>
    %c6 = arith.constant 6 : index
    %c0_42 = arith.constant 0 : index
    %c0_43 = arith.constant 0 : index
    %46 = vector.load %arg3[%c6, %c0_42, %c0_43] : memref<14x128x128xf32, #tpu.memory_space<vmem>>, vector<1x128x128xf32>
    %47 = vector.shape_cast %46 : vector<1x128x128xf32> to vector<128x128xf32>
    %cst_44 = arith.constant dense<0.000000e+00> : vector<16x128xf32>
    %48 = tpu.matmul %45, %47, %cst_44 {dimension_numbers = #tpu.dot_dimension_numbers<[1], [0], [0], [1], [0, 0, 1, 1], [], []>} : vector<16x128xf32>, vector<128x128xf32>, vector<16x128xf32> -> vector<16x128xf32>
    %c7 = arith.constant 7 : index
    %c0_45 = arith.constant 0 : index
    %c0_46 = arith.constant 0 : index
    %49 = vector.load %arg3[%c7, %c0_45, %c0_46] : memref<14x128x128xf32, #tpu.memory_space<vmem>>, vector<1x128x128xf32>
    %50 = vector.shape_cast %49 : vector<1x128x128xf32> to vector<128x128xf32>
    %cst_47 = arith.constant dense<0.000000e+00> : vector<16x128xf32>
    %51 = tpu.matmul %45, %50, %cst_47 {dimension_numbers = #tpu.dot_dimension_numbers<[1], [0], [0], [1], [0, 0, 1, 1], [], []>} : vector<16x128xf32>, vector<128x128xf32>, vector<16x128xf32> -> vector<16x128xf32>
    %c8 = arith.constant 8 : index
    %c0_48 = arith.constant 0 : index
    %c0_49 = arith.constant 0 : index
    %52 = vector.load %arg3[%c8, %c0_48, %c0_49] : memref<14x128x128xf32, #tpu.memory_space<vmem>>, vector<1x128x128xf32>
    %53 = vector.shape_cast %52 : vector<1x128x128xf32> to vector<128x128xf32>
    %cst_50 = arith.constant dense<0.000000e+00> : vector<16x128xf32>
    %54 = tpu.matmul %45, %53, %cst_50 {dimension_numbers = #tpu.dot_dimension_numbers<[1], [0], [0], [1], [0, 0, 1, 1], [], []>} : vector<16x128xf32>, vector<128x128xf32>, vector<16x128xf32> -> vector<16x128xf32>
    %cst_51 = arith.constant dense<0.000000e+00> : vector<16x128xf32>
    %55 = tpu.matmul %3, %48, %cst_51 {dimension_numbers = #tpu.dot_dimension_numbers<[1], [0], [0], [1], [0, 0, 1, 1], [], []>} : vector<16x16xf32>, vector<16x128xf32>, vector<16x128xf32> -> vector<16x128xf32>
    %56 = arith.addf %51, %55 : vector<16x128xf32>
    %cst_52 = arith.constant dense<0.000000e+00> : vector<16x128xf32>
    %57 = tpu.matmul %5, %54, %cst_52 {dimension_numbers = #tpu.dot_dimension_numbers<[1], [0], [0], [1], [0, 0, 1, 1], [], []>} : vector<16x16xf32>, vector<16x128xf32>, vector<16x128xf32> -> vector<16x128xf32>
    %58 = arith.addf %56, %57 : vector<16x128xf32>
    %59 = vector.broadcast %8 : vector<1x128xf32> to vector<16x128xf32>
    %60 = arith.addf %58, %59 : vector<16x128xf32>
    %cst_53 = arith.constant 0.000000e+00 : f32
    %61 = vector.broadcast %cst_53 : f32 to vector<16x128xf32>
    %62 = arith.maximumf %60, %61 : vector<16x128xf32>
    %c9 = arith.constant 9 : index
    %c0_54 = arith.constant 0 : index
    %c0_55 = arith.constant 0 : index
    %63 = vector.load %arg3[%c9, %c0_54, %c0_55] : memref<14x128x128xf32, #tpu.memory_space<vmem>>, vector<1x128x128xf32>
    %64 = vector.shape_cast %63 : vector<1x128x128xf32> to vector<128x128xf32>
    %cst_56 = arith.constant dense<0.000000e+00> : vector<16x128xf32>
    %65 = tpu.matmul %62, %64, %cst_56 {dimension_numbers = #tpu.dot_dimension_numbers<[1], [0], [0], [1], [0, 0, 1, 1], [], []>} : vector<16x128xf32>, vector<128x128xf32>, vector<16x128xf32> -> vector<16x128xf32>
    %c10 = arith.constant 10 : index
    %c0_57 = arith.constant 0 : index
    %c0_58 = arith.constant 0 : index
    %66 = vector.load %arg3[%c10, %c0_57, %c0_58] : memref<14x128x128xf32, #tpu.memory_space<vmem>>, vector<1x128x128xf32>
    %67 = vector.shape_cast %66 : vector<1x128x128xf32> to vector<128x128xf32>
    %cst_59 = arith.constant dense<0.000000e+00> : vector<16x128xf32>
    %68 = tpu.matmul %62, %67, %cst_59 {dimension_numbers = #tpu.dot_dimension_numbers<[1], [0], [0], [1], [0, 0, 1, 1], [], []>} : vector<16x128xf32>, vector<128x128xf32>, vector<16x128xf32> -> vector<16x128xf32>
    %c11 = arith.constant 11 : index
    %c0_60 = arith.constant 0 : index
    %c0_61 = arith.constant 0 : index
    %69 = vector.load %arg3[%c11, %c0_60, %c0_61] : memref<14x128x128xf32, #tpu.memory_space<vmem>>, vector<1x128x128xf32>
    %70 = vector.shape_cast %69 : vector<1x128x128xf32> to vector<128x128xf32>
    %cst_62 = arith.constant dense<0.000000e+00> : vector<16x128xf32>
    %71 = tpu.matmul %62, %70, %cst_62 {dimension_numbers = #tpu.dot_dimension_numbers<[1], [0], [0], [1], [0, 0, 1, 1], [], []>} : vector<16x128xf32>, vector<128x128xf32>, vector<16x128xf32> -> vector<16x128xf32>
    %cst_63 = arith.constant dense<0.000000e+00> : vector<16x128xf32>
    %72 = tpu.matmul %3, %65, %cst_63 {dimension_numbers = #tpu.dot_dimension_numbers<[1], [0], [0], [1], [0, 0, 1, 1], [], []>} : vector<16x16xf32>, vector<16x128xf32>, vector<16x128xf32> -> vector<16x128xf32>
    %73 = arith.addf %68, %72 : vector<16x128xf32>
    %cst_64 = arith.constant dense<0.000000e+00> : vector<16x128xf32>
    %74 = tpu.matmul %5, %71, %cst_64 {dimension_numbers = #tpu.dot_dimension_numbers<[1], [0], [0], [1], [0, 0, 1, 1], [], []>} : vector<16x16xf32>, vector<16x128xf32>, vector<16x128xf32> -> vector<16x128xf32>
    %75 = arith.addf %73, %74 : vector<16x128xf32>
    %76 = vector.broadcast %9 : vector<1x128xf32> to vector<16x128xf32>
    %77 = arith.addf %75, %76 : vector<16x128xf32>
    %78 = arith.addf %77, %45 : vector<16x128xf32>
    %cst_65 = arith.constant 0.000000e+00 : f32
    %79 = vector.broadcast %cst_65 : f32 to vector<16x128xf32>
    %80 = arith.maximumf %78, %79 : vector<16x128xf32>
    %c12 = arith.constant 12 : index
    %c0_66 = arith.constant 0 : index
    %c0_67 = arith.constant 0 : index
    %81 = vector.load %arg3[%c12, %c0_66, %c0_67] : memref<14x128x128xf32, #tpu.memory_space<vmem>>, vector<1x128x128xf32>
    %82 = vector.shape_cast %81 : vector<1x128x128xf32> to vector<128x128xf32>
    %cst_68 = arith.constant dense<0.000000e+00> : vector<16x128xf32>
    %83 = tpu.matmul %80, %82, %cst_68 {dimension_numbers = #tpu.dot_dimension_numbers<[1], [0], [0], [1], [0, 0, 1, 1], [], []>} : vector<16x128xf32>, vector<128x128xf32>, vector<16x128xf32> -> vector<16x128xf32>
    %c13 = arith.constant 13 : index
    %c0_69 = arith.constant 0 : index
    %c0_70 = arith.constant 0 : index
    %84 = vector.load %arg3[%c13, %c0_69, %c0_70] : memref<14x128x128xf32, #tpu.memory_space<vmem>>, vector<1x128x128xf32>
    %85 = vector.shape_cast %84 : vector<1x128x128xf32> to vector<128x128xf32>
    %cst_71 = arith.constant dense<0.000000e+00> : vector<16x128xf32>
    %86 = tpu.matmul %45, %85, %cst_71 {dimension_numbers = #tpu.dot_dimension_numbers<[1], [0], [0], [1], [0, 0, 1, 1], [], []>} : vector<16x128xf32>, vector<128x128xf32>, vector<16x128xf32> -> vector<16x128xf32>
    %87 = arith.addf %83, %86 : vector<16x128xf32>
    %88 = vector.broadcast %10 : vector<1x128xf32> to vector<16x128xf32>
    %89 = arith.addf %87, %88 : vector<16x128xf32>
    %cst_72 = arith.constant 0.000000e+00 : f32
    %90 = vector.broadcast %cst_72 : f32 to vector<16x128xf32>
    %91 = arith.maximumf %89, %90 : vector<16x128xf32>
    %c0_73 = arith.constant 0 : index
    %c0_74 = arith.constant 0 : index
    %c0_75 = arith.constant 0 : index
    %92 = vector.load %arg5[%c0_73, %c0_74, %c0_75] : memref<1x16x128xf32, #tpu.memory_space<vmem>>, vector<1x16x128xf32>
    %93 = vector.shape_cast %92 : vector<1x16x128xf32> to vector<16x128xf32>
    %94 = vector.shape_cast %91 : vector<16x128xf32> to vector<1x16x128xf32>
    tpu.vector_store %arg5[%c0_73, %c0_74, %c0_75], %94 {strides = array<i32>} : memref<1x16x128xf32, #tpu.memory_space<vmem>>, vector<1x16x128xf32>,
    return
  }
  func.func @transform_0(%arg0: i32) -> (i32, i32, i32) {
    %c0_i32 = arith.constant 0 : i32
    %c0_i32_0 = arith.constant 0 : i32
    %c0_i32_1 = arith.constant 0 : i32
    return %arg0, %c0_i32, %c0_i32_0 : i32, i32, i32
  }
  func.func @transform_1(%arg0: i32) -> (i32, i32, i32) {
    %c0_i32 = arith.constant 0 : i32
    %c0_i32_0 = arith.constant 0 : i32
    %c0_i32_1 = arith.constant 0 : i32
    %c0_i32_2 = arith.constant 0 : i32
    return %c0_i32, %c0_i32_0, %c0_i32_1 : i32, i32, i32
  }
  func.func @transform_2(%arg0: i32) -> (i32, i32, i32) {
    %c0_i32 = arith.constant 0 : i32
    %c0_i32_0 = arith.constant 0 : i32
    %c0_i32_1 = arith.constant 0 : i32
    %c0_i32_2 = arith.constant 0 : i32
    return %c0_i32, %c0_i32_0, %c0_i32_1 : i32, i32, i32
  }
  func.func @transform_3(%arg0: i32) -> (i32, i32) {
    %c0_i32 = arith.constant 0 : i32
    %c0_i32_0 = arith.constant 0 : i32
    %c0_i32_1 = arith.constant 0 : i32
    return %c0_i32, %c0_i32_0 : i32, i32
  }
  func.func @transform_4(%arg0: i32) -> (i32, i32, i32) {
    %c0_i32 = arith.constant 0 : i32
    %c0_i32_0 = arith.constant 0 : i32
    %c0_i32_1 = arith.constant 0 : i32
    return %arg0, %c0_i32, %c0_i32_0 : i32, i32, i32
  }
}

</mosaic_0001>

<llo_original>
// kernel: tree_forward.1
$region0: #{tree_forward.1}
  #allocation0 [shape = 'u32[]', space=smem, size = 0x4, offset = 0x4, fixed_abs, tag = 'smem constant byte address 0x4 - core index']
  #allocation1 [shape = 'u32[72,128]{1,0:T(1,128)}', space=vmem, size = 0x9000, scoped, tag = 'internal scratch']
  %s0 = inlined_call_operand.vmem [shape: f32[1,16,128], index: 0, kind: input, shape index: {}]
  %s1 = inlined_call_operand.vmem [shape: f32[2,16,16], index: 1, kind: input, shape index: {}]
  %s2 = inlined_call_operand.hbm [shape: f32[14,128,128], index: 2, kind: input, shape index: {}]
  %s3 = inlined_call_operand.vmem [shape: f32[5,128], index: 3, kind: input, shape index: {}]
  %s4 = inlined_call_operand.vmem [shape: f32[1,16,128], index: 4, kind: output, shape index: {}]
  %s5 = sld [smem:[#allocation0]]
  $region30: #{tree_forward.1} parent=0
    _
  %s7 = ssub.s32 1, %s5
  %s8 = scalar_select 0, %s7, %s5
  $region1: #{tree_forward.1} parent=0
    #allocation2 [shape = 'u8[917504]{0}', space=vmem, size = 0xe0000, scoped, tag = 'input window, operand 2, single buffered']
    #allocation3 [shape = 's32[1]{0}', space=sflag, size = 0x4, scoped, tag = 'scoped memory for tree_forward.1']
    %9 = vsyncpa [#allocation3], 0
    // Predicated region
    $region2: #{tree_forward.1} parent=1 // pred_check
      _
    $region3: #{tree_forward.1} parent=1 // pred_check_branch
      %11 = sbr.rel (0) target = $region5
    $region4: #{tree_forward.1} parent=1 // pred_region
      _
    $region5: #{tree_forward.1} parent=1 // pred_fallthru
      _
    // Predicated region
    $region6: #{tree_forward.1} parent=1 // pred_check
      _
    $region7: #{tree_forward.1} parent=1 // pred_check_branch
      %13 = sbr.rel (0) target = $region9
    $region8: #{tree_forward.1} parent=1 // pred_region
      _
    $region9: #{tree_forward.1} parent=1 // pred_fallthru
      _
    // Predicated region
    $region10: #{tree_forward.1} parent=1 // pred_check
      _
    $region11: #{tree_forward.1} parent=1 // pred_check_branch
      %15 = sbr.rel (0) target = $region13
    $region12: #{tree_forward.1} parent=1 // pred_region
      %17 = vsyncadd [#allocation3], 0
      %s18 = sshll.u32 %s2, 4
      %s19 = int_to_ptr.hbm [resolvable:$true] %s18
      %s20 = sshll.u32 [#allocation2], 4
      %s21 = int_to_ptr.vmem [resolvable:$true] %s20
      %26 = dma.hbm_to_vmem [thread:$0]  %s19, 28672, %s21, [#allocation3], 128, 128, 8
    $region13: #{tree_forward.1} parent=1 // pred_fallthru
      _
    // Predicated region
    $region14: #{tree_forward.1} parent=1 // pred_check
      _
    $region15: #{tree_forward.1} parent=1 // pred_check_branch
      %28 = sbr.rel (0) target = $region17
    $region16: #{tree_forward.1} parent=1 // pred_region
      _
    $region17: #{tree_forward.1} parent=1 // pred_fallthru
      _
    // Predicated region
    $region18: #{tree_forward.1} parent=1 // pred_check
      _
    $region19: #{tree_forward.1} parent=1 // pred_check_branch
      %30 = sbr.rel (0) target = $region21
    $region20: #{tree_forward.1} parent=1 // pred_region
      %32 = dma.done [#allocation3], 28672
    $region21: #{tree_forward.1} parent=1 // pred_fallthru
      _
    %v33 = vld [vmem:[%s0] sm:$0xff]
    %v34 = vld [vmem:[%s0 + $0x8] sm:$0xff]
    %v35 = vld [vmem:[%s1] sm:$0xff]
    %v36 = vld [vmem:[%s1 + $0x8] sm:$0xff]
    %s37 = scalar_lea.vmem %s1, 16
    %v38 = vld [vmem:[%s37] sm:$0xff]
    %v39 = vld [vmem:[%s37 + $0x8] sm:$0xff]
    %v40 = vld [vmem:[%s3] sm:$0x1]
    %v41 = vld [vmem:[%s3 + $0x1] sm:$0x1]
    %v42 = vld [vmem:[%s3 + $0x2] sm:$0x1]
    %v43 = vld [vmem:[%s3 + $0x3] sm:$0x1]
    %v44 = vld [vmem:[%s3 + $0x4] sm:$0x1]
    %v45 = vld [vmem:[#allocation2] sm:$0xff]
    %v46 = vld [vmem:[#allocation2 + $0x8] sm:$0xff]
    %v47 = vld [vmem:[#allocation2 + $0x10] sm:$0xff]
    %v48 = vld [vmem:[#allocation2 + $0x18] sm:$0xff]
    %v49 = vld [vmem:[#allocation2 + $0x20] sm:$0xff]
    %v50 = vld [vmem:[#allocation2 + $0x28] sm:$0xff]
    %v51 = vld [vmem:[#allocation2 + $0x30] sm:$0xff]
    %v52 = vld [vmem:[#allocation2 + $0x38] sm:$0xff]
    %v53 = vld [vmem:[#allocation2 + $0x40] sm:$0xff]
    %v54 = vld [vmem:[#allocation2 + $0x48] sm:$0xff]
    %v55 = vld [vmem:[#allocation2 + $0x50] sm:$0xff]
    %v56 = vld [vmem:[#allocation2 + $0x58] sm:$0xff]
    %v57 = vld [vmem:[#allocation2 + $0x60] sm:$0xff]
    %v58 = vld [vmem:[#allocation2 + $0x68] sm:$0xff]
    %v59 = vld [vmem:[#allocation2 + $0x70] sm:$0xff]
    %v60 = vld [vmem:[#allocation2 + $0x78] sm:$0xff]
    %61 = vmatpush.msra.mxu0 %v60
    %62 = vmatpush.msra.mxu0 %v59
    %63 = vmatpush.msra.mxu0 %v58
    %64 = vmatpush.msra.mxu0 %v57
    %65 = vmatpush.msra.mxu0 %v56
    %66 = vmatpush.msra.mxu0 %v55
    %67 = vmatpush.msra.mxu0 %v54
    %68 = vmatpush.msra.mxu0 %v53
    %69 = vmatpush.msra.mxu0 %v52
    %70 = vmatpush.msra.mxu0 %v51
    %71 = vmatpush.msra.mxu0 %v50
    %72 = vmatpush.msra.mxu0 %v49
    %73 = vmatpush.msra.mxu0 %v48
    %74 = vmatpush.msra.mxu0 %v47
    %75 = vmatpush.msra.mxu0 %v46
    %76 = vmatpush.msra.mxu0 %v45
    %77 = vmatmul.f32.gmra.mxu0 %v33
    %v78 = vpop.f32.mrf.mxu0
    %v79 = vadd.f32 0.0, %v78
    %80 = vmatmul.f32.gmra.mxu0 %v34
    %v81 = vpop.f32.mrf.mxu0
    %v82 = vadd.f32 0.0, %v81
    %83 = vdwg.mxu0
    %s84 = scalar_lea.vmem [#allocation2], 128
    %v85 = vld [vmem:[%s84] sm:$0xff]
    %v86 = vld [vmem:[%s84 + $0x8] sm:$0xff]
    %v87 = vld [vmem:[%s84 + $0x10] sm:$0xff]
    %v88 = vld [vmem:[%s84 + $0x18] sm:$0xff]
    %v89 = vld [vmem:[%s84 + $0x20] sm:$0xff]
    %v90 = vld [vmem:[%s84 + $0x28] sm:$0xff]
    %v91 = vld [vmem:[%s84 + $0x30] sm:$0xff]
    %v92 = vld [vmem:[%s84 + $0x38] sm:$0xff]
    %v93 = vld [vmem:[%s84 + $0x40] sm:$0xff]
    %v94 = vld [vmem:[%s84 + $0x48] sm:$0xff]
    %v95 = vld [vmem:[%s84 + $0x50] sm:$0xff]
    %v96 = vld [vmem:[%s84 + $0x58] sm:$0xff]
    %v97 = vld [vmem:[%s84 + $0x60] sm:$0xff]
    %v98 = vld [vmem:[%s84 + $0x68] sm:$0xff]
    %v99 = vld [vmem:[%s84 + $0x70] sm:$0xff]
    %v100 = vld [vmem:[%s84 + $0x78] sm:$0xff]
    %s101 = scalar_lea.vmem [#allocation2], 256
    %v102 = vld [vmem:[%s101] sm:$0xff]
    %v103 = vld [vmem:[%s101 + $0x8] sm:$0xff]
    %v104 = vld [vmem:[%s101 + $0x10] sm:$0xff]
    %v105 = vld [vmem:[%s101 + $0x18] sm:$0xff]
    %v106 = vld [vmem:[%s101 + $0x20] sm:$0xff]
    %v107 = vld [vmem:[%s101 + $0x28] sm:$0xff]
    %v108 = vld [vmem:[%s101 + $0x30] sm:$0xff]
    %v109 = vld [vmem:[%s101 + $0x38] sm:$0xff]
    %v110 = vld [vmem:[%s101 + $0x40] sm:$0xff]
    %v111 = vld [vmem:[%s101 + $0x48] sm:$0xff]
    %v112 = vld [vmem:[%s101 + $0x50] sm:$0xff]
    %v113 = vld [vmem:[%s101 + $0x58] sm:$0xff]
    %v114 = vld [vmem:[%s101 + $0x60] sm:$0xff]
    %v115 = vld [vmem:[%s101 + $0x68] sm:$0xff]
    %v116 = vld [vmem:[%s101 + $0x70] sm:$0xff]
    %v117 = vld [vmem:[%s101 + $0x78] sm:$0xff]
    %118 = vmatpush.msra.mxu0 %v117
    %119 = vmatpush.msra.mxu0 %v116
    %120 = vmatpush.msra.mxu0 %v115
    %121 = vmatpush.msra.mxu0 %v114
    %122 = vmatpush.msra.mxu0 %v113
    %123 = vmatpush.msra.mxu0 %v112
    %124 = vmatpush.msra.mxu0 %v111
    %125 = vmatpush.msra.mxu0 %v110
    %126 = vmatpush.msra.mxu0 %v109
    %127 = vmatpush.msra.mxu0 %v108
    %128 = vmatpush.msra.mxu0 %v107
    %129 = vmatpush.msra.mxu0 %v106
    %130 = vmatpush.msra.mxu0 %v105
    %131 = vmatpush.msra.mxu0 %v104
    %132 = vmatpush.msra.mxu0 %v103
    %133 = vmatpush.msra.mxu0 %v102
    %134 = vmatmul.f32.gmra.mxu0 %v33
    %v135 = vpop.f32.mrf.mxu0
    %v136 = vadd.f32 0.0, %v135
    %137 = vmatmul.f32.gmra.mxu0 %v34
    %v138 = vpop.f32.mrf.mxu0
    %v139 = vadd.f32 0.0, %v138
    %140 = vdwg.mxu0
    %vm141 = vcmask 130048
    %v143 = vsel %vm141, %v35, 0
    %v146 = vsel %vm141, %v36, 0
    %148 = vmatpush.msra.mxu0 0.0
    %149 = vmatpush.msra.mxu0 0.0
    %150 = vmatpush.msra.mxu0 0.0
    %151 = vmatpush.msra.mxu0 0.0
    %152 = vmatpush.msra.mxu0 0.0
    %153 = vmatpush.msra.mxu0 0.0
    %154 = vmatpush.msra.mxu0 0.0
    %155 = vmatpush.msra.mxu0 0.0
    %156 = vmatpush.msra.mxu0 0.0
    %157 = vmatpush.msra.mxu0 0.0
    %158 = vmatpush.msra.mxu0 0.0
    %159 = vmatpush.msra.mxu0 0.0
    %160 = vmatpush.msra.mxu0 0.0
    %161 = vmatpush.msra.mxu0 0.0
    %162 = vmatpush.msra.mxu0 %v82
    %163 = vmatpush.msra.mxu0 %v79
    %164 = vmatmul.f32.gmra.mxu0 %v143
    %v165 = vpop.f32.mrf.mxu0
    %v166 = vadd.f32 0.0, %v165
    %167 = vmatmul.f32.gmra.mxu0 %v146
    %v168 = vpop.f32.mrf.mxu0
    %v169 = vadd.f32 0.0, %v168
    %170 = vdwg.mxu0
    %171 = vmatpush.msra.mxu0 %v100
    %172 = vmatpush.msra.mxu0 %v99
    %173 = vmatpush.msra.mxu0 %v98
    %174 = vmatpush.msra.mxu0 %v97
    %175 = vmatpush.msra.mxu0 %v96
    %176 = vmatpush.msra.mxu0 %v95
    %177 = vmatpush.msra.mxu0 %v94
    %178 = vmatpush.msra.mxu0 %v93
    %179 = vmatpush.msra.mxu0 %v92
    %180 = vmatpush.msra.mxu0 %v91
    %181 = vmatpush.msra.mxu0 %v90
    %182 = vmatpush.msra.mxu0 %v89
    %183 = vmatpush.msra.mxu0 %v88
    %184 = vmatpush.msra.mxu0 %v87
    %185 = vmatpush.msra.mxu0 %v86
    %186 = vmatpush.msra.mxu0 %v85
    %187 = vmatmul.f32.gmra.mxu0 %v33
    %v188 = vpop.f32.mrf.mxu0
    %v189 = vadd.f32 %v166, %v188
    %190 = vmatmul.f32.gmra.mxu0 %v34
    %v191 = vpop.f32.mrf.mxu0
    %v192 = vadd.f32 %v169, %v191
    %193 = vdwg.mxu0
    %v195 = vsel %vm141, %v38, 0
    %v198 = vsel %vm141, %v39, 0
    %200 = vmatpush.msra.mxu0 0.0
    %201 = vmatpush.msra.mxu0 0.0
    %202 = vmatpush.msra.mxu0 0.0
    %203 = vmatpush.msra.mxu0 0.0
    %204 = vmatpush.msra.mxu0 0.0
    %205 = vmatpush.msra.mxu0 0.0
    %206 = vmatpush.msra.mxu0 0.0
    %207 = vmatpush.msra.mxu0 0.0
    %208 = vmatpush.msra.mxu0 0.0
    %209 = vmatpush.msra.mxu0 0.0
    %210 = vmatpush.msra.mxu0 0.0
    %211 = vmatpush.msra.mxu0 0.0
    %212 = vmatpush.msra.mxu0 0.0
    %213 = vmatpush.msra.mxu0 0.0
    %214 = vmatpush.msra.mxu0 %v139
    %215 = vmatpush.msra.mxu0 %v136
    %216 = vmatmul.f32.gmra.mxu0 %v195
    %v217 = vpop.f32.mrf.mxu0
    %v218 = vadd.f32 0.0, %v217
    %219 = vmatmul.f32.gmra.mxu0 %v198
    %v220 = vpop.f32.mrf.mxu0
    %v221 = vadd.f32 0.0, %v220
    %222 = vdwg.mxu0
    %v223 = vadd.f32 %v189, %v218
    %v224 = vadd.f32 %v192, %v221
    %v225 = vperm.slane %v40, 0
    %v226 = vadd.f32 %v223, %v225
    %v227 = vadd.f32 %v224, %v225
    %v228 = vmax.f32 %v226, 0.0
    %v229 = vmax.f32 %v227, 0.0
    %s230 = scalar_lea.vmem [#allocation2], 384
    %v231 = vld [vmem:[%s230] sm:$0xff]
    %v232 = vld [vmem:[%s230 + $0x8] sm:$0xff]
    %v233 = vld [vmem:[%s230 + $0x10] sm:$0xff]
    %v234 = vld [vmem:[%s230 + $0x18] sm:$0xff]
    %v235 = vld [vmem:[%s230 + $0x20] sm:$0xff]
    %v236 = vld [vmem:[%s230 + $0x28] sm:$0xff]
    %v237 = vld [vmem:[%s230 + $0x30] sm:$0xff]
    %v238 = vld [vmem:[%s230 + $0x38] sm:$0xff]
    %v239 = vld [vmem:[%s230 + $0x40] sm:$0xff]
    %v240 = vld [vmem:[%s230 + $0x48] sm:$0xff]
    %v241 = vld [vmem:[%s230 + $0x50] sm:$0xff]
    %v242 = vld [vmem:[%s230 + $0x58] sm:$0xff]
    %v243 = vld [vmem:[%s230 + $0x60] sm:$0xff]
    %v244 = vld [vmem:[%s230 + $0x68] sm:$0xff]
    %v245 = vld [vmem:[%s230 + $0x70] sm:$0xff]
    %v246 = vld [vmem:[%s230 + $0x78] sm:$0xff]
    %247 = vmatpush.msra.mxu0 %v246
    %248 = vmatpush.msra.mxu0 %v245
    %249 = vmatpush.msra.mxu0 %v244
    %250 = vmatpush.msra.mxu0 %v243
    %251 = vmatpush.msra.mxu0 %v242
    %252 = vmatpush.msra.mxu0 %v241
    %253 = vmatpush.msra.mxu0 %v240
    %254 = vmatpush.msra.mxu0 %v239
    %255 = vmatpush.msra.mxu0 %v238
    %256 = vmatpush.msra.mxu0 %v237
    %257 = vmatpush.msra.mxu0 %v236
    %258 = vmatpush.msra.mxu0 %v235
    %259 = vmatpush.msra.mxu0 %v234
    %260 = vmatpush.msra.mxu0 %v233
    %261 = vmatpush.msra.mxu0 %v232
    %262 = vmatpush.msra.mxu0 %v231
    %263 = vmatmul.f32.gmra.mxu0 %v228
    %v264 = vpop.f32.mrf.mxu0
    %v265 = vadd.f32 0.0, %v264
    %266 = vmatmul.f32.gmra.mxu0 %v229
    %v267 = vpop.f32.mrf.mxu0
    %v268 = vadd.f32 0.0, %v267
    %269 = vdwg.mxu0
    %s270 = scalar_lea.vmem [#allocation2], 512
    %v271 = vld [vmem:[%s270] sm:$0xff]
    %v272 = vld [vmem:[%s270 + $0x8] sm:$0xff]
    %v273 = vld [vmem:[%s270 + $0x10] sm:$0xff]
    %v274 = vld [vmem:[%s270 + $0x18] sm:$0xff]
    %v275 = vld [vmem:[%s270 + $0x20] sm:$0xff]
    %v276 = vld [vmem:[%s270 + $0x28] sm:$0xff]
    %v277 = vld [vmem:[%s270 + $0x30] sm:$0xff]
    %v278 = vld [vmem:[%s270 + $0x38] sm:$0xff]
    %v279 = vld [vmem:[%s270 + $0x40] sm:$0xff]
    %v280 = vld [vmem:[%s270 + $0x48] sm:$0xff]
    %v281 = vld [vmem:[%s270 + $0x50] sm:$0xff]
    %v282 = vld [vmem:[%s270 + $0x58] sm:$0xff]
    %v283 = vld [vmem:[%s270 + $0x60] sm:$0xff]
    %v284 = vld [vmem:[%s270 + $0x68] sm:$0xff]
    %v285 = vld [vmem:[%s270 + $0x70] sm:$0xff]
    %v286 = vld [vmem:[%s270 + $0x78] sm:$0xff]
    %s287 = scalar_lea.vmem [#allocation2], 640
    %v288 = vld [vmem:[%s287] sm:$0xff]
    %v289 = vld [vmem:[%s287 + $0x8] sm:$0xff]
    %v290 = vld [vmem:[%s287 + $0x10] sm:$0xff]
    %v291 = vld [vmem:[%s287 + $0x18] sm:$0xff]
    %v292 = vld [vmem:[%s287 + $0x20] sm:$0xff]
    %v293 = vld [vmem:[%s287 + $0x28] sm:$0xff]
    %v294 = vld [vmem:[%s287 + $0x30] sm:$0xff]
    %v295 = vld [vmem:[%s287 + $0x38] sm:$0xff]
    %v296 = vld [vmem:[%s287 + $0x40] sm:$0xff]
    %v297 = vld [vmem:[%s287 + $0x48] sm:$0xff]
    %v298 = vld [vmem:[%s287 + $0x50] sm:$0xff]
    %v299 = vld [vmem:[%s287 + $0x58] sm:$0xff]
    %v300 = vld [vmem:[%s287 + $0x60] sm:$0xff]
    %v301 = vld [vmem:[%s287 + $0x68] sm:$0xff]
    %v302 = vld [vmem:[%s287 + $0x70] sm:$0xff]
    %v303 = vld [vmem:[%s287 + $0x78] sm:$0xff]
    %304 = vmatpush.msra.mxu0 %v303
    %305 = vmatpush.msra.mxu0 %v302
    %306 = vmatpush.msra.mxu0 %v301
    %307 = vmatpush.msra.mxu0 %v300
    %308 = vmatpush.msra.mxu0 %v299
    %309 = vmatpush.msra.mxu0 %v298
    %310 = vmatpush.msra.mxu0 %v297
    %311 = vmatpush.msra.mxu0 %v296
    %312 = vmatpush.msra.mxu0 %v295
    %313 = vmatpush.msra.mxu0 %v294
    %314 = vmatpush.msra.mxu0 %v293
    %315 = vmatpush.msra.mxu0 %v292
    %316 = vmatpush.msra.mxu0 %v291
    %317 = vmatpush.msra.mxu0 %v290
    %318 = vmatpush.msra.mxu0 %v289
    %319 = vmatpush.msra.mxu0 %v288
    %320 = vmatmul.f32.gmra.mxu0 %v228
    %v321 = vpop.f32.mrf.mxu0
    %v322 = vadd.f32 0.0, %v321
    %323 = vmatmul.f32.gmra.mxu0 %v229
    %v324 = vpop.f32.mrf.mxu0
    %v325 = vadd.f32 0.0, %v324
    %326 = vdwg.mxu0
    %327 = vmatpush.msra.mxu0 0.0
    %328 = vmatpush.msra.mxu0 0.0
    %329 = vmatpush.msra.mxu0 0.0
    %330 = vmatpush.msra.mxu0 0.0
    %331 = vmatpush.msra.mxu0 0.0
    %332 = vmatpush.msra.mxu0 0.0
    %333 = vmatpush.msra.mxu0 0.0
    %334 = vmatpush.msra.mxu0 0.0
    %335 = vmatpush.msra.mxu0 0.0
    %336 = vmatpush.msra.mxu0 0.0
    %337 = vmatpush.msra.mxu0 0.0
    %338 = vmatpush.msra.mxu0 0.0
    %339 = vmatpush.msra.mxu0 0.0
    %340 = vmatpush.msra.mxu0 0.0
    %341 = vmatpush.msra.mxu0 %v268
    %342 = vmatpush.msra.mxu0 %v265
    %343 = vmatmul.f32.gmra.mxu0 %v143
    %v344 = vpop.f32.mrf.mxu0
    %v345 = vadd.f32 0.0, %v344
    %346 = vmatmul.f32.gmra.mxu0 %v146
    %v347 = vpop.f32.mrf.mxu0
    %v348 = vadd.f32 0.0, %v347
    %349 = vdwg.mxu0
    %350 = vmatpush.msra.mxu0 %v286
    %351 = vmatpush.msra.mxu0 %v285
    %352 = vmatpush.msra.mxu0 %v284
    %353 = vmatpush.msra.mxu0 %v283
    %354 = vmatpush.msra.mxu0 %v282
    %355 = vmatpush.msra.mxu0 %v281
    %356 = vmatpush.msra.mxu0 %v280
    %357 = vmatpush.msra.mxu0 %v279
    %358 = vmatpush.msra.mxu0 %v278
    %359 = vmatpush.msra.mxu0 %v277
    %360 = vmatpush.msra.mxu0 %v276
    %361 = vmatpush.msra.mxu0 %v275
    %362 = vmatpush.msra.mxu0 %v274
    %363 = vmatpush.msra.mxu0 %v273
    %364 = vmatpush.msra.mxu0 %v272
    %365 = vmatpush.msra.mxu0 %v271
    %366 = vmatmul.f32.gmra.mxu0 %v228
    %v367 = vpop.f32.mrf.mxu0
    %v368 = vadd.f32 %v345, %v367
    %369 = vmatmul.f32.gmra.mxu0 %v229
    %v370 = vpop.f32.mrf.mxu0
    %v371 = vadd.f32 %v348, %v370
    %372 = vdwg.mxu0
    %373 = vmatpush.msra.mxu0 0.0
    %374 = vmatpush.msra.mxu0 0.0
    %375 = vmatpush.msra.mxu0 0.0
    %376 = vmatpush.msra.mxu0 0.0
    %377 = vmatpush.msra.mxu0 0.0
    %378 = vmatpush.msra.mxu0 0.0
    %379 = vmatpush.msra.mxu0 0.0
    %380 = vmatpush.msra.mxu0 0.0
    %381 = vmatpush.msra.mxu0 0.0
    %382 = vmatpush.msra.mxu0 0.0
    %383 = vmatpush.msra.mxu0 0.0
    %384 = vmatpush.msra.mxu0 0.0
    %385 = vmatpush.msra.mxu0 0.0
    %386 = vmatpush.msra.mxu0 0.0
    %387 = vmatpush.msra.mxu0 %v325
    %388 = vmatpush.msra.mxu0 %v322
    %389 = vmatmul.f32.gmra.mxu0 %v195
    %v390 = vpop.f32.mrf.mxu0
    %v391 = vadd.f32 0.0, %v390
    %392 = vmatmul.f32.gmra.mxu0 %v198
    %v393 = vpop.f32.mrf.mxu0
    %v394 = vadd.f32 0.0, %v393
    %395 = vdwg.mxu0
    %v396 = vadd.f32 %v368, %v391
    %v397 = vadd.f32 %v371, %v394
    %v398 = vperm.slane %v41, 0
    %v399 = vadd.f32 %v396, %v398
    %v400 = vadd.f32 %v397, %v398
    %v401 = vadd.f32 %v399, %v33
    %v402 = vadd.f32 %v400, %v34
    %v403 = vmax.f32 %v401, 0.0
    %v404 = vmax.f32 %v402, 0.0
    %s405 = scalar_lea.vmem [#allocation2], 768
    %v406 = vld [vmem:[%s405] sm:$0xff]
    %v407 = vld [vmem:[%s405 + $0x8] sm:$0xff]
    %v408 = vld [vmem:[%s405 + $0x10] sm:$0xff]
    %v409 = vld [vmem:[%s405 + $0x18] sm:$0xff]
    %v410 = vld [vmem:[%s405 + $0x20] sm:$0xff]
    %v411 = vld [vmem:[%s405 + $0x28] sm:$0xff]
    %v412 = vld [vmem:[%s405 + $0x30] sm:$0xff]
    %v413 = vld [vmem:[%s405 + $0x38] sm:$0xff]
    %v414 = vld [vmem:[%s405 + $0x40] sm:$0xff]
    %v415 = vld [vmem:[%s405 + $0x48] sm:$0xff]
    %v416 = vld [vmem:[%s405 + $0x50] sm:$0xff]
    %v417 = vld [vmem:[%s405 + $0x58] sm:$0xff]
    %v418 = vld [vmem:[%s405 + $0x60] sm:$0xff]
    %v419 = vld [vmem:[%s405 + $0x68] sm:$0xff]
    %v420 = vld [vmem:[%s405 + $0x70] sm:$0xff]
    %v421 = vld [vmem:[%s405 + $0x78] sm:$0xff]
    %422 = vmatpush.msra.mxu0 %v421
    %423 = vmatpush.msra.mxu0 %v420
    %424 = vmatpush.msra.mxu0 %v419
    %425 = vmatpush.msra.mxu0 %v418
    %426 = vmatpush.msra.mxu0 %v417
    %427 = vmatpush.msra.mxu0 %v416
    %428 = vmatpush.msra.mxu0 %v415
    %429 = vmatpush.msra.mxu0 %v414
    %430 = vmatpush.msra.mxu0 %v413
    %431 = vmatpush.msra.mxu0 %v412
    %432 = vmatpush.msra.mxu0 %v411
    %433 = vmatpush.msra.mxu0 %v410
    %434 = vmatpush.msra.mxu0 %v409
    %435 = vmatpush.msra.mxu0 %v408
    %436 = vmatpush.msra.mxu0 %v407
    %437 = vmatpush.msra.mxu0 %v406
    %438 = vmatmul.f32.gmra.mxu0 %v403
    %v439 = vpop.f32.mrf.mxu0
    %v440 = vadd.f32 0.0, %v439
    %441 = vmatmul.f32.gmra.mxu0 %v404
    %v442 = vpop.f32.mrf.mxu0
    %v443 = vadd.f32 0.0, %v442
    %444 = vdwg.mxu0
    %s445 = scalar_lea.vmem [#allocation2], 896
    %v446 = vld [vmem:[%s445] sm:$0xff]
    %v447 = vld [vmem:[%s445 + $0x8] sm:$0xff]
    %v448 = vld [vmem:[%s445 + $0x10] sm:$0xff]
    %v449 = vld [vmem:[%s445 + $0x18] sm:$0xff]
    %v450 = vld [vmem:[%s445 + $0x20] sm:$0xff]
    %v451 = vld [vmem:[%s445 + $0x28] sm:$0xff]
    %v452 = vld [vmem:[%s445 + $0x30] sm:$0xff]
    %v453 = vld [vmem:[%s445 + $0x38] sm:$0xff]
    %v454 = vld [vmem:[%s445 + $0x40] sm:$0xff]
    %v455 = vld [vmem:[%s445 + $0x48] sm:$0xff]
    %v456 = vld [vmem:[%s445 + $0x50] sm:$0xff]
    %v457 = vld [vmem:[%s445 + $0x58] sm:$0xff]
    %v458 = vld [vmem:[%s445 + $0x60] sm:$0xff]
    %v459 = vld [vmem:[%s445 + $0x68] sm:$0xff]
    %v460 = vld [vmem:[%s445 + $0x70] sm:$0xff]
    %v461 = vld [vmem:[%s445 + $0x78] sm:$0xff]
    %s462 = scalar_lea.vmem [#allocation2], 1024
    %v463 = vld [vmem:[%s462] sm:$0xff]
    %v464 = vld [vmem:[%s462 + $0x8] sm:$0xff]
    %v465 = vld [vmem:[%s462 + $0x10] sm:$0xff]
    %v466 = vld [vmem:[%s462 + $0x18] sm:$0xff]
    %v467 = vld [vmem:[%s462 + $0x20] sm:$0xff]
    %v468 = vld [vmem:[%s462 + $0x28] sm:$0xff]
    %v469 = vld [vmem:[%s462 + $0x30] sm:$0xff]
    %v470 = vld [vmem:[%s462 + $0x38] sm:$0xff]
    %v471 = vld [vmem:[%s462 + $0x40] sm:$0xff]
    %v472 = vld [vmem:[%s462 + $0x48] sm:$0xff]
    %v473 = vld [vmem:[%s462 + $0x50] sm:$0xff]
    %v474 = vld [vmem:[%s462 + $0x58] sm:$0xff]
    %v475 = vld [vmem:[%s462 + $0x60] sm:$0xff]
    %v476 = vld [vmem:[%s462 + $0x68] sm:$0xff]
    %v477 = vld [vmem:[%s462 + $0x70] sm:$0xff]
    %v478 = vld [vmem:[%s462 + $0x78] sm:$0xff]
    %479 = vmatpush.msra.mxu0 %v478
    %480 = vmatpush.msra.mxu0 %v477
    %481 = vmatpush.msra.mxu0 %v476
    %482 = vmatpush.msra.mxu0 %v475
    %483 = vmatpush.msra.mxu0 %v474
    %484 = vmatpush.msra.mxu0 %v473
    %485 = vmatpush.msra.mxu0 %v472
    %486 = vmatpush.msra.mxu0 %v471
    %487 = vmatpush.msra.mxu0 %v470
    %488 = vmatpush.msra.mxu0 %v469
    %489 = vmatpush.msra.mxu0 %v468
    %490 = vmatpush.msra.mxu0 %v467
    %491 = vmatpush.msra.mxu0 %v466
    %492 = vmatpush.msra.mxu0 %v465
    %493 = vmatpush.msra.mxu0 %v464
    %494 = vmatpush.msra.mxu0 %v463
    %495 = vmatmul.f32.gmra.mxu0 %v403
    %v496 = vpop.f32.mrf.mxu0
    %v497 = vadd.f32 0.0, %v496
    %498 = vmatmul.f32.gmra.mxu0 %v404
    %v499 = vpop.f32.mrf.mxu0
    %v500 = vadd.f32 0.0, %v499
    %501 = vdwg.mxu0
    %502 = vmatpush.msra.mxu0 0.0
    %503 = vmatpush.msra.mxu0 0.0
    %504 = vmatpush.msra.mxu0 0.0
    %505 = vmatpush.msra.mxu0 0.0
    %506 = vmatpush.msra.mxu0 0.0
    %507 = vmatpush.msra.mxu0 0.0
    %508 = vmatpush.msra.mxu0 0.0
    %509 = vmatpush.msra.mxu0 0.0
    %510 = vmatpush.msra.mxu0 0.0
    %511 = vmatpush.msra.mxu0 0.0
    %512 = vmatpush.msra.mxu0 0.0
    %513 = vmatpush.msra.mxu0 0.0
    %514 = vmatpush.msra.mxu0 0.0
    %515 = vmatpush.msra.mxu0 0.0
    %516 = vmatpush.msra.mxu0 %v443
    %517 = vmatpush.msra.mxu0 %v440
    %518 = vmatmul.f32.gmra.mxu0 %v143
    %v519 = vpop.f32.mrf.mxu0
    %v520 = vadd.f32 0.0, %v519
    %521 = vmatmul.f32.gmra.mxu0 %v146
    %v522 = vpop.f32.mrf.mxu0
    %v523 = vadd.f32 0.0, %v522
    %524 = vdwg.mxu0
    %525 = vmatpush.msra.mxu0 %v461
    %526 = vmatpush.msra.mxu0 %v460
    %527 = vmatpush.msra.mxu0 %v459
    %528 = vmatpush.msra.mxu0 %v458
    %529 = vmatpush.msra.mxu0 %v457
    %530 = vmatpush.msra.mxu0 %v456
    %531 = vmatpush.msra.mxu0 %v455
    %532 = vmatpush.msra.mxu0 %v454
    %533 = vmatpush.msra.mxu0 %v453
    %534 = vmatpush.msra.mxu0 %v452
    %535 = vmatpush.msra.mxu0 %v451
    %536 = vmatpush.msra.mxu0 %v450
    %537 = vmatpush.msra.mxu0 %v449
    %538 = vmatpush.msra.mxu0 %v448
    %539 = vmatpush.msra.mxu0 %v447
    %540 = vmatpush.msra.mxu0 %v446
    %541 = vmatmul.f32.gmra.mxu0 %v403
    %v542 = vpop.f32.mrf.mxu0
    %v543 = vadd.f32 %v520, %v542
    %544 = vmatmul.f32.gmra.mxu0 %v404
    %v545 = vpop.f32.mrf.mxu0
    %v546 = vadd.f32 %v523, %v545
    %547 = vdwg.mxu0
    %548 = vmatpush.msra.mxu0 0.0
    %549 = vmatpush.msra.mxu0 0.0
    %550 = vmatpush.msra.mxu0 0.0
    %551 = vmatpush.msra.mxu0 0.0
    %552 = vmatpush.msra.mxu0 0.0
    %553 = vmatpush.msra.mxu0 0.0
    %554 = vmatpush.msra.mxu0 0.0
    %555 = vmatpush.msra.mxu0 0.0
    %556 = vmatpush.msra.mxu0 0.0
    %557 = vmatpush.msra.mxu0 0.0
    %558 = vmatpush.msra.mxu0 0.0
    %559 = vmatpush.msra.mxu0 0.0
    %560 = vmatpush.msra.mxu0 0.0
    %561 = vmatpush.msra.mxu0 0.0
    %562 = vmatpush.msra.mxu0 %v500
    %563 = vmatpush.msra.mxu0 %v497
    %564 = vmatmul.f32.gmra.mxu0 %v195
    %v565 = vpop.f32.mrf.mxu0
    %v566 = vadd.f32 0.0, %v565
    %567 = vmatmul.f32.gmra.mxu0 %v198
    %v568 = vpop.f32.mrf.mxu0
    %v569 = vadd.f32 0.0, %v568
    %570 = vdwg.mxu0
    %v571 = vadd.f32 %v543, %v566
    %v572 = vadd.f32 %v546, %v569
    %v573 = vperm.slane %v42, 0
    %v574 = vadd.f32 %v571, %v573
    %v575 = vadd.f32 %v572, %v573
    %v576 = vmax.f32 %v574, 0.0
    %v577 = vmax.f32 %v575, 0.0
    %s578 = scalar_lea.vmem [#allocation2], 1152
    %v579 = vld [vmem:[%s578] sm:$0xff]
    %v580 = vld [vmem:[%s578 + $0x8] sm:$0xff]
    %v581 = vld [vmem:[%s578 + $0x10] sm:$0xff]
    %v582 = vld [vmem:[%s578 + $0x18] sm:$0xff]
    %v583 = vld [vmem:[%s578 + $0x20] sm:$0xff]
    %v584 = vld [vmem:[%s578 + $0x28] sm:$0xff]
    %v585 = vld [vmem:[%s578 + $0x30] sm:$0xff]
    %v586 = vld [vmem:[%s578 + $0x38] sm:$0xff]
    %v587 = vld [vmem:[%s578 + $0x40] sm:$0xff]
    %v588 = vld [vmem:[%s578 + $0x48] sm:$0xff]
    %v589 = vld [vmem:[%s578 + $0x50] sm:$0xff]
    %v590 = vld [vmem:[%s578 + $0x58] sm:$0xff]
    %v591 = vld [vmem:[%s578 + $0x60] sm:$0xff]
    %v592 = vld [vmem:[%s578 + $0x68] sm:$0xff]
    %v593 = vld [vmem:[%s578 + $0x70] sm:$0xff]
    %v594 = vld [vmem:[%s578 + $0x78] sm:$0xff]
    %595 = vmatpush.msra.mxu0 %v594
    %596 = vmatpush.msra.mxu0 %v593
    %597 = vmatpush.msra.mxu0 %v592
    %598 = vmatpush.msra.mxu0 %v591
    %599 = vmatpush.msra.mxu0 %v590
    %600 = vmatpush.msra.mxu0 %v589
    %601 = vmatpush.msra.mxu0 %v588
    %602 = vmatpush.msra.mxu0 %v587
    %603 = vmatpush.msra.mxu0 %v586
    %604 = vmatpush.msra.mxu0 %v585
    %605 = vmatpush.msra.mxu0 %v584
    %606 = vmatpush.msra.mxu0 %v583
    %607 = vmatpush.msra.mxu0 %v582
    %608 = vmatpush.msra.mxu0 %v581
    %609 = vmatpush.msra.mxu0 %v580
    %610 = vmatpush.msra.mxu0 %v579
    %611 = vmatmul.f32.gmra.mxu0 %v576
    %v612 = vpop.f32.mrf.mxu0
    %v613 = vadd.f32 0.0, %v612
    %614 = vmatmul.f32.gmra.mxu0 %v577
    %v615 = vpop.f32.mrf.mxu0
    %v616 = vadd.f32 0.0, %v615
    %617 = vdwg.mxu0
    %s618 = scalar_lea.vmem [#allocation2], 1280
    %v619 = vld [vmem:[%s618] sm:$0xff]
    %v620 = vld [vmem:[%s618 + $0x8] sm:$0xff]
    %v621 = vld [vmem:[%s618 + $0x10] sm:$0xff]
    %v622 = vld [vmem:[%s618 + $0x18] sm:$0xff]
    %v623 = vld [vmem:[%s618 + $0x20] sm:$0xff]
    %v624 = vld [vmem:[%s618 + $0x28] sm:$0xff]
    %v625 = vld [vmem:[%s618 + $0x30] sm:$0xff]
    %v626 = vld [vmem:[%s618 + $0x38] sm:$0xff]
    %v627 = vld [vmem:[%s618 + $0x40] sm:$0xff]
    %v628 = vld [vmem:[%s618 + $0x48] sm:$0xff]
    %v629 = vld [vmem:[%s618 + $0x50] sm:$0xff]
    %v630 = vld [vmem:[%s618 + $0x58] sm:$0xff]
    %v631 = vld [vmem:[%s618 + $0x60] sm:$0xff]
    %v632 = vld [vmem:[%s618 + $0x68] sm:$0xff]
    %v633 = vld [vmem:[%s618 + $0x70] sm:$0xff]
    %v634 = vld [vmem:[%s618 + $0x78] sm:$0xff]
    %s635 = scalar_lea.vmem [#allocation2], 1408
    %v636 = vld [vmem:[%s635] sm:$0xff]
    %v637 = vld [vmem:[%s635 + $0x8] sm:$0xff]
    %v638 = vld [vmem:[%s635 + $0x10] sm:$0xff]
    %v639 = vld [vmem:[%s635 + $0x18] sm:$0xff]
    %v640 = vld [vmem:[%s635 + $0x20] sm:$0xff]
    %v641 = vld [vmem:[%s635 + $0x28] sm:$0xff]
    %v642 = vld [vmem:[%s635 + $0x30] sm:$0xff]
    %v643 = vld [vmem:[%s635 + $0x38] sm:$0xff]
    %v644 = vld [vmem:[%s635 + $0x40] sm:$0xff]
    %v645 = vld [vmem:[%s635 + $0x48] sm:$0xff]
    %v646 = vld [vmem:[%s635 + $0x50] sm:$0xff]
    %v647 = vld [vmem:[%s635 + $0x58] sm:$0xff]
    %v648 = vld [vmem:[%s635 + $0x60] sm:$0xff]
    %v649 = vld [vmem:[%s635 + $0x68] sm:$0xff]
    %v650 = vld [vmem:[%s635 + $0x70] sm:$0xff]
    %v651 = vld [vmem:[%s635 + $0x78] sm:$0xff]
    %652 = vmatpush.msra.mxu0 %v651
    %653 = vmatpush.msra.mxu0 %v650
    %654 = vmatpush.msra.mxu0 %v649
    %655 = vmatpush.msra.mxu0 %v648
    %656 = vmatpush.msra.mxu0 %v647
    %657 = vmatpush.msra.mxu0 %v646
    %658 = vmatpush.msra.mxu0 %v645
    %659 = vmatpush.msra.mxu0 %v644
    %660 = vmatpush.msra.mxu0 %v643
    %661 = vmatpush.msra.mxu0 %v642
    %662 = vmatpush.msra.mxu0 %v641
    %663 = vmatpush.msra.mxu0 %v640
    %664 = vmatpush.msra.mxu0 %v639
    %665 = vmatpush.msra.mxu0 %v638
    %666 = vmatpush.msra.mxu0 %v637
    %667 = vmatpush.msra.mxu0 %v636
    %668 = vmatmul.f32.gmra.mxu0 %v576
    %v669 = vpop.f32.mrf.mxu0
    %v670 = vadd.f32 0.0, %v669
    %671 = vmatmul.f32.gmra.mxu0 %v577
    %v672 = vpop.f32.mrf.mxu0
    %v673 = vadd.f32 0.0, %v672
    %674 = vdwg.mxu0
    %675 = vmatpush.msra.mxu0 0.0
    %676 = vmatpush.msra.mxu0 0.0
    %677 = vmatpush.msra.mxu0 0.0
    %678 = vmatpush.msra.mxu0 0.0
    %679 = vmatpush.msra.mxu0 0.0
    %680 = vmatpush.msra.mxu0 0.0
    %681 = vmatpush.msra.mxu0 0.0
    %682 = vmatpush.msra.mxu0 0.0
    %683 = vmatpush.msra.mxu0 0.0
    %684 = vmatpush.msra.mxu0 0.0
    %685 = vmatpush.msra.mxu0 0.0
    %686 = vmatpush.msra.mxu0 0.0
    %687 = vmatpush.msra.mxu0 0.0
    %688 = vmatpush.msra.mxu0 0.0
    %689 = vmatpush.msra.mxu0 %v616
    %690 = vmatpush.msra.mxu0 %v613
    %691 = vmatmul.f32.gmra.mxu0 %v143
    %v692 = vpop.f32.mrf.mxu0
    %v693 = vadd.f32 0.0, %v692
    %694 = vmatmul.f32.gmra.mxu0 %v146
    %v695 = vpop.f32.mrf.mxu0
    %v696 = vadd.f32 0.0, %v695
    %697 = vdwg.mxu0
    %698 = vmatpush.msra.mxu0 %v634
    %699 = vmatpush.msra.mxu0 %v633
    %700 = vmatpush.msra.mxu0 %v632
    %701 = vmatpush.msra.mxu0 %v631
    %702 = vmatpush.msra.mxu0 %v630
    %703 = vmatpush.msra.mxu0 %v629
    %704 = vmatpush.msra.mxu0 %v628
    %705 = vmatpush.msra.mxu0 %v627
    %706 = vmatpush.msra.mxu0 %v626
    %707 = vmatpush.msra.mxu0 %v625
    %708 = vmatpush.msra.mxu0 %v624
    %709 = vmatpush.msra.mxu0 %v623
    %710 = vmatpush.msra.mxu0 %v622
    %711 = vmatpush.msra.mxu0 %v621
    %712 = vmatpush.msra.mxu0 %v620
    %713 = vmatpush.msra.mxu0 %v619
    %714 = vmatmul.f32.gmra.mxu0 %v576
    %v715 = vpop.f32.mrf.mxu0
    %v716 = vadd.f32 %v693, %v715
    %717 = vmatmul.f32.gmra.mxu0 %v577
    %v718 = vpop.f32.mrf.mxu0
    %v719 = vadd.f32 %v696, %v718
    %720 = vdwg.mxu0
    %721 = vmatpush.msra.mxu0 0.0
    %722 = vmatpush.msra.mxu0 0.0
    %723 = vmatpush.msra.mxu0 0.0
    %724 = vmatpush.msra.mxu0 0.0
    %725 = vmatpush.msra.mxu0 0.0
    %726 = vmatpush.msra.mxu0 0.0
    %727 = vmatpush.msra.mxu0 0.0
    %728 = vmatpush.msra.mxu0 0.0
    %729 = vmatpush.msra.mxu0 0.0
    %730 = vmatpush.msra.mxu0 0.0
    %731 = vmatpush.msra.mxu0 0.0
    %732 = vmatpush.msra.mxu0 0.0
    %733 = vmatpush.msra.mxu0 0.0
    %734 = vmatpush.msra.mxu0 0.0
    %735 = vmatpush.msra.mxu0 %v673
    %736 = vmatpush.msra.mxu0 %v670
    %737 = vmatmul.f32.gmra.mxu0 %v195
    %v738 = vpop.f32.mrf.mxu0
    %v739 = vadd.f32 0.0, %v738
    %740 = vmatmul.f32.gmra.mxu0 %v198
    %v741 = vpop.f32.mrf.mxu0
    %v742 = vadd.f32 0.0, %v741
    %743 = vdwg.mxu0
    %v744 = vadd.f32 %v716, %v739
    %v745 = vadd.f32 %v719, %v742
    %v746 = vperm.slane %v43, 0
    %v747 = vadd.f32 %v744, %v746
    %v748 = vadd.f32 %v745, %v746
    %v749 = vadd.f32 %v747, %v403
    %v750 = vadd.f32 %v748, %v404
    %v751 = vmax.f32 %v749, 0.0
    %v752 = vmax.f32 %v750, 0.0
    %s753 = scalar_lea.vmem [#allocation2], 1536
    %v754 = vld [vmem:[%s753] sm:$0xff]
    %v755 = vld [vmem:[%s753 + $0x8] sm:$0xff]
    %v756 = vld [vmem:[%s753 + $0x10] sm:$0xff]
    %v757 = vld [vmem:[%s753 + $0x18] sm:$0xff]
    %v758 = vld [vmem:[%s753 + $0x20] sm:$0xff]
    %v759 = vld [vmem:[%s753 + $0x28] sm:$0xff]
    %v760 = vld [vmem:[%s753 + $0x30] sm:$0xff]
    %v761 = vld [vmem:[%s753 + $0x38] sm:$0xff]
    %v762 = vld [vmem:[%s753 + $0x40] sm:$0xff]
    %v763 = vld [vmem:[%s753 + $0x48] sm:$0xff]
    %v764 = vld [vmem:[%s753 + $0x50] sm:$0xff]
    %v765 = vld [vmem:[%s753 + $0x58] sm:$0xff]
    %v766 = vld [vmem:[%s753 + $0x60] sm:$0xff]
    %v767 = vld [vmem:[%s753 + $0x68] sm:$0xff]
    %v768 = vld [vmem:[%s753 + $0x70] sm:$0xff]
    %v769 = vld [vmem:[%s753 + $0x78] sm:$0xff]
    %s770 = scalar_lea.vmem [#allocation2], 1664
    %v771 = vld [vmem:[%s770] sm:$0xff]
    %v772 = vld [vmem:[%s770 + $0x8] sm:$0xff]
    %v773 = vld [vmem:[%s770 + $0x10] sm:$0xff]
    %v774 = vld [vmem:[%s770 + $0x18] sm:$0xff]
    %v775 = vld [vmem:[%s770 + $0x20] sm:$0xff]
    %v776 = vld [vmem:[%s770 + $0x28] sm:$0xff]
    %v777 = vld [vmem:[%s770 + $0x30] sm:$0xff]
    %v778 = vld [vmem:[%s770 + $0x38] sm:$0xff]
    %v779 = vld [vmem:[%s770 + $0x40] sm:$0xff]
    %v780 = vld [vmem:[%s770 + $0x48] sm:$0xff]
    %v781 = vld [vmem:[%s770 + $0x50] sm:$0xff]
    %v782 = vld [vmem:[%s770 + $0x58] sm:$0xff]
    %v783 = vld [vmem:[%s770 + $0x60] sm:$0xff]
    %v784 = vld [vmem:[%s770 + $0x68] sm:$0xff]
    %v785 = vld [vmem:[%s770 + $0x70] sm:$0xff]
    %v786 = vld [vmem:[%s770 + $0x78] sm:$0xff]
    %787 = vmatpush.msra.mxu0 %v786
    %788 = vmatpush.msra.mxu0 %v785
    %789 = vmatpush.msra.mxu0 %v784
    %790 = vmatpush.msra.mxu0 %v783
    %791 = vmatpush.msra.mxu0 %v782
    %792 = vmatpush.msra.mxu0 %v781
    %793 = vmatpush.msra.mxu0 %v780
    %794 = vmatpush.msra.mxu0 %v779
    %795 = vmatpush.msra.mxu0 %v778
    %796 = vmatpush.msra.mxu0 %v777
    %797 = vmatpush.msra.mxu0 %v776
    %798 = vmatpush.msra.mxu0 %v775
    %799 = vmatpush.msra.mxu0 %v774
    %800 = vmatpush.msra.mxu0 %v773
    %801 = vmatpush.msra.mxu0 %v772
    %802 = vmatpush.msra.mxu0 %v771
    %803 = vmatmul.f32.gmra.mxu0 %v403
    %v804 = vpop.f32.mrf.mxu0
    %v805 = vadd.f32 0.0, %v804
    %806 = vmatmul.f32.gmra.mxu0 %v404
    %v807 = vpop.f32.mrf.mxu0
    %v808 = vadd.f32 0.0, %v807
    %809 = vdwg.mxu0
    %810 = vmatpush.msra.mxu0 %v769
    %811 = vmatpush.msra.mxu0 %v768
    %812 = vmatpush.msra.mxu0 %v767
    %813 = vmatpush.msra.mxu0 %v766
    %814 = vmatpush.msra.mxu0 %v765
    %815 = vmatpush.msra.mxu0 %v764
    %816 = vmatpush.msra.mxu0 %v763
    %817 = vmatpush.msra.mxu0 %v762
    %818 = vmatpush.msra.mxu0 %v761
    %819 = vmatpush.msra.mxu0 %v760
    %820 = vmatpush.msra.mxu0 %v759
    %821 = vmatpush.msra.mxu0 %v758
    %822 = vmatpush.msra.mxu0 %v757
    %823 = vmatpush.msra.mxu0 %v756
    %824 = vmatpush.msra.mxu0 %v755
    %825 = vmatpush.msra.mxu0 %v754
    %826 = vmatmul.f32.gmra.mxu0 %v751
    %v827 = vpop.f32.mrf.mxu0
    %v828 = vadd.f32 %v805, %v827
    %829 = vmatmul.f32.gmra.mxu0 %v752
    %v830 = vpop.f32.mrf.mxu0
    %v831 = vadd.f32 %v808, %v830
    %832 = vdwg.mxu0
    %v833 = vperm.slane %v44, 0
    %v834 = vadd.f32 %v828, %v833
    %v835 = vadd.f32 %v831, %v833
    %v836 = vmax.f32 %v834, 0.0
    %v837 = vmax.f32 %v835, 0.0
    %838 = vst [vmem:[%s4] sm:$0xff] %v836
    %839 = vst [vmem:[%s4 + $0x8] sm:$0xff] %v837
    // Predicated region
    $region22: #{tree_forward.1} parent=1 // pred_check
      _
    $region23: #{tree_forward.1} parent=1 // pred_check_branch
      %841 = sbr.rel (0) target = $region25
    $region24: #{tree_forward.1} parent=1 // pred_region
      _
    $region25: #{tree_forward.1} parent=1 // pred_fallthru
      _
    // Predicated region
    $region26: #{tree_forward.1} parent=1 // pred_check
      _
    $region27: #{tree_forward.1} parent=1 // pred_check_branch
      %843 = sbr.rel (0) target = $region29
    $region28: #{tree_forward.1} parent=1 // pred_region
      _
    $region29: #{tree_forward.1} parent=1 // pred_fallthru
      _
    %844 = vsyncpa [#allocation3], 1

</llo_original>
